<compile_context>
chip_gen: v5e
topology: v5e:2x2
jax: 0.10.0
libtpu: 0.0.40
codegen_flags: <defaults>
</compile_context>

<pallas_src>
import functools

import jax
import jax.numpy as jnp
from jax.experimental import pallas as pl
from jax.experimental.pallas import tpu as pltpu


def _round_up(x, m):
    return ((x + m - 1) // m) * m


def _make_kernel(tm, m_valid, needs_mask, compute_dtype):
    """Fused (encoder+MLP+decoder) + L1 partial-sum kernel.

    Block shapes seen by the kernel:
      cd_ref  : (1, C, tm)       cond temporal-diff tile   [lane-dense, compute_dtype]
      gd_ref  : (1, C, tm)       gt   temporal-diff tile   [lane-dense, compute_dtype]
      ba_ref  : (1, hidden, 1)   per-batch fused bias (cond_vec + b_enc@w1), f32
      waT_ref : (hidden, C)      (w_enc @ w1).T            [compute_dtype]
      wbT_ref : (C, hidden)      (w2 @ w_dec).T            [compute_dtype]
      bb_ref  : (C, 1)           b2 @ w_dec + b_dec, f32
      out_ref : (1, C, tm)       per-batch L1 partial sums (resident over m axis)
    """

    def kernel(cd_ref, gd_ref, ba_ref, waT_ref, wbT_ref, bb_ref, out_ref):
        m = pl.program_id(1)

        @pl.when(m == 0)
        def _():
            out_ref[...] = jnp.zeros_like(out_ref)

        x = cd_ref[0]                             # [C, tm]  (bf16/f32, no upcast)
        gt_d = gd_ref[0].astype(jnp.float32)      # [C, tm]  f32 for the VPU subtract
        ba = ba_ref[0]                            # [hidden, 1] f32

        # fused encoder + MLP-in  (MXU, f32 accumulate, lane-dense [hidden, tm])
        h = jnp.dot(waT_ref[...], x, preferred_element_type=jnp.float32)
        h = jnp.maximum(h + ba, 0.0).astype(compute_dtype)
        # fused MLP-out + decoder (MXU, lane-dense [C, tm])
        pred_diff = jnp.dot(wbT_ref[...], h,
                            preferred_element_type=jnp.float32) + bb_ref[...]

        # |gt_prev + pred_diff - gt_next| == |pred_diff - gt_diff|
        err = jnp.abs(pred_diff - gt_d)

        if needs_mask:
            is_last = m == pl.num_programs(1) - 1

            @pl.when(is_last)
            def _():
                # select (not multiply) so garbage in the partial tail block
                # (NaN/Inf from undefined VMEM contents) cannot leak in.
                lane = jax.lax.broadcasted_iota(jnp.int32, err.shape, 1)
                ok = m * tm + lane < m_valid
                out_ref[...] = out_ref[...] + jnp.where(ok, err, 0.0)[None]

            @pl.when(jnp.logical_not(is_last))
            def _():
                out_ref[...] = out_ref[...] + err[None]
        else:
            out_ref[...] = out_ref[...] + err[None]

    return kernel


def motion_model_forward(params, cond_frames, gt_frames, temporal_distance,
                         action, *, tm=32768, compute_dtype=jnp.bfloat16,
                         vmem_limit_bytes=48 * 1024 * 1024):
    """Returns the scalar L1 diff_loss, matching MotionModel.forward."""
    B, C, T, H, W = cond_frames.shape
    M = (T - 1) * H * W
    hidden = params["w1"].shape[1]

    # Lane-dense [B, C, M] pixel layout: pure reshape of NCTHW, no transpose.
    # Diffs are emitted directly in compute_dtype (bf16 default) to halve the
    # streamed HBM bytes of the only large tensors.
    cond_diff = (cond_frames[:, :, 1:] - cond_frames[:, :, :-1]
                 ).reshape(B, C, M).astype(compute_dtype)
    gt_diff = (gt_frames[:, :, 1:] - gt_frames[:, :, :-1]
               ).reshape(B, C, M).astype(compute_dtype)

    # Tile size: multiple of 128, capped to the (rounded-up) problem size.
    # No jnp.pad pre-pass: a non-divisible tail block is masked in-kernel.
    tm = max(128, min(_round_up(tm, 128), _round_up(M, 128)))
    n_m = pl.cdiv(M, tm)
    needs_mask = (M % tm) != 0

    # Algebraic fusion of the linear encoder / decoder into the MLP (host side).
    waT = (params["w_enc"] @ params["w1"]).T.astype(compute_dtype)   # [hidden, C]
    wbT = (params["w2"] @ params["w_dec"]).T.astype(compute_dtype)   # [C, hidden]
    cond_vec = (temporal_distance[:, None] * params["w_td"][None, :]
                + action @ params["w_act"] + params["b1"][None, :])  # [B, hidden]
    ba = (cond_vec + params["b_enc"] @ params["w1"])                 # [B, hidden]
    ba = ba.reshape(B, hidden, 1).astype(jnp.float32)
    bb = (params["b2"] @ params["w_dec"] + params["b_dec"]).reshape(C, 1)
    bb = bb.astype(jnp.float32)

    kernel = _make_kernel(tm, M, needs_mask, compute_dtype)

    partials = pl.pallas_call(
        kernel,
        out_shape=jax.ShapeDtypeStruct((B, C, tm), jnp.float32),
        grid=(B, n_m),
        in_specs=[
            pl.BlockSpec((1, C, tm), lambda b, m: (b, 0, m)),      # cond_diff
            pl.BlockSpec((1, C, tm), lambda b, m: (b, 0, m)),      # gt_diff
            pl.BlockSpec((1, hidden, 1), lambda b, m: (b, 0, 0)),  # ba (per batch)
            pl.BlockSpec((hidden, C), lambda b, m: (0, 0)),        # waT (resident)
            pl.BlockSpec((C, hidden), lambda b, m: (0, 0)),        # wbT (resident)
            pl.BlockSpec((C, 1), lambda b, m: (0, 0)),             # bb  (resident)
        ],
        out_specs=pl.BlockSpec((1, C, tm), lambda b, m: (b, 0, 0)),
        compiler_params=pltpu.CompilerParams(
            dimension_semantics=("parallel", "arbitrary"),
            vmem_limit_bytes=vmem_limit_bytes),
    )(cond_diff, gt_diff, ba, waT, wbT, bb)

    count = B * C * M  # == number of elements in F.l1_loss's mean
    return jnp.sum(partials) / count


def init_params(key, c_in, c_lat, hidden, a_dim):
    ks = jax.random.split(key, 6)
    s = 0.1
    return {
        "w_enc": s * jax.random.normal(ks[0], (c_in, c_lat), jnp.float32),
        "b_enc": jnp.zeros((1, c_lat), jnp.float32),
        "w1":    s * jax.random.normal(ks[1], (c_lat, hidden), jnp.float32),
        "b1":    jnp.zeros((hidden,), jnp.float32),
        "w2":    s * jax.random.normal(ks[2], (hidden, c_lat), jnp.float32),
        "b2":    jnp.zeros((1, c_lat), jnp.float32),
        "w_dec": s * jax.random.normal(ks[3], (c_lat, c_in), jnp.float32),
        "b_dec": jnp.zeros((1, c_in), jnp.float32),
        "w_td":  s * jax.random.normal(ks[4], (hidden,), jnp.float32),
        "w_act": s * jax.random.normal(ks[5], (a_dim, hidden), jnp.float32),
    }


def _reference(params, cond_frames, gt_frames, td, action):
    """Pure-JAX, unfused, spec-faithful f32 forward (for correctness check)."""
    B, C, T, H, W = cond_frames.shape

    def to_bmc(x):
        return jnp.transpose(x, (0, 2, 3, 4, 1)).reshape(B, -1, C)

    cond_diff = to_bmc(cond_frames[:, :, 1:] - cond_frames[:, :, :-1])
    gt_prev = to_bmc(gt_frames[:, :, :-1])
    gt_next = to_bmc(gt_frames[:, :, 1:])
    motion = cond_diff @ params["w_enc"] + params["b_enc"]
    cond_vec = (td[:, None] * params["w_td"][None, :]
                + action @ params["w_act"] + params["b1"][None, :])
    h = jnp.maximum(motion @ params["w1"] + cond_vec[:, None, :], 0.0)
    pred_motion = h @ params["w2"] + params["b2"]
    pred_diff = pred_motion @ params["w_dec"] + params["b_dec"]
    pred_frames = gt_prev + pred_diff
    return jnp.mean(jnp.abs(pred_frames - gt_next))


if __name__ == "__main__":
    # (T-1)*H*W = 1280 pixels per batch -> with tm=512: 3 m-tiles, masked tail.
    B, C, T, H, W = 2, 4, 5, 16, 20
    C_LAT, HIDDEN, A_DIM = 8, 32, 4

    key = jax.random.PRNGKey(0)
    k_cond, k_gt, k_td, k_act, k_par = jax.random.split(key, 5)

    cond_frames = jax.random.normal(k_cond, (B, C, T, H, W), jnp.float32)
    gt_frames = jax.random.normal(k_gt, (B, C, T, H, W), jnp.float32)
    temporal_distance = jax.random.uniform(k_td, (B,), jnp.float32, 1.0, 4.0)
    action = jax.random.normal(k_act, (B, A_DIM), jnp.float32)

    params = init_params(k_par, C, C_LAT, HIDDEN, A_DIM)
    ref = _reference(params, cond_frames, gt_frames, temporal_distance, action)

    # 1) f32 path: tight check of the fused-kernel semantics (masked-tail path).
    fwd_f32 = jax.jit(functools.partial(motion_model_forward, tm=512,
                                        compute_dtype=jnp.float32))
    loss_f32 = jax.block_until_ready(
        fwd_f32(params, cond_frames, gt_frames, temporal_distance, action))
    assert jnp.allclose(loss_f32, ref, rtol=1e-5, atol=1e-5), (loss_f32, ref)

    # 2) bf16 streaming path (the fast default): loose check (bf16 quantization
    #    of the diffs/weights shifts the loss by ~1e-2 relative at most).
    fwd_bf16 = jax.jit(functools.partial(motion_model_forward, tm=512))
    loss_bf16 = jax.block_until_ready(
        fwd_bf16(params, cond_frames, gt_frames, temporal_distance, action))
    assert jnp.allclose(loss_bf16, ref, rtol=5e-2, atol=5e-2), (loss_bf16, ref)

    print("KERNEL_OK")
</pallas_src>

<mosaic_0001>
module attributes {stable_mosaic.version = 11 : i64} {
  func.func @kernel(%arg0: i32, %arg1: i32, %arg2: memref<1x4x512xf32, #tpu.memory_space<vmem>>, %arg3: memref<1x4x512xf32, #tpu.memory_space<vmem>>, %arg4: memref<1x32x1xf32, #tpu.memory_space<vmem>>, %arg5: memref<32x4xf32, #tpu.memory_space<vmem>>, %arg6: memref<4x32xf32, #tpu.memory_space<vmem>>, %arg7: memref<4x1xf32, #tpu.memory_space<vmem>>, %arg8: memref<1x4x512xf32, #tpu.memory_space<vmem>>) attributes {dimension_semantics = [#tpu.dimension_semantics<parallel>, #tpu.dimension_semantics<arbitrary>], iteration_bounds = array<i64: 2, 3>, scalar_prefetch = 0 : i64, scratch_operands = 0 : i64, tpu.core_type = #tpu.core_type<tc>, window_params = [{transform_indices = @transform_0, window_bounds = array<i64: 1, 4, 512>}, {transform_indices = @transform_1, window_bounds = array<i64: 1, 4, 512>}, {transform_indices = @transform_2, window_bounds = array<i64: 1, 32, 1>}, {pipeline_mode = #tpu.pipeline_mode<synchronous>, transform_indices = @transform_3, window_bounds = array<i64: 32, 4>}, {pipeline_mode = #tpu.pipeline_mode<synchronous>, transform_indices = @transform_4, window_bounds = array<i64: 4, 32>}, {pipeline_mode = #tpu.pipeline_mode<synchronous>, transform_indices = @transform_5, window_bounds = array<i64: 4, 1>}, {transform_indices = @transform_6, window_bounds = array<i64: 1, 4, 512>}]} {
    %c0_i32 = arith.constant 0 : i32
    %0 = arith.cmpi eq, %arg1, %c0_i32 : i32
    %1 = arith.extui %0 : i1 to i32
    %c0_i32_0 = arith.constant 0 : i32
    %2 = arith.cmpi ne, %1, %c0_i32_0 : i32
    scf.if %2 {
      %cst_19 = arith.constant 0.000000e+00 : f32
      %28 = vector.broadcast %cst_19 : f32 to vector<1x4x512xf32>
      %c0_20 = arith.constant 0 : index
      %c0_21 = arith.constant 0 : index
      %c0_22 = arith.constant 0 : index
      %29 = vector.load %arg8[%c0_20, %c0_21, %c0_22] : memref<1x4x512xf32, #tpu.memory_space<vmem>>, vector<1x4x512xf32>
      tpu.vector_store %arg8[%c0_20, %c0_21, %c0_22], %28 {strides = array<i32>} : memref<1x4x512xf32, #tpu.memory_space<vmem>>, vector<1x4x512xf32>,
    } else {
    }
    %c0 = arith.constant 0 : index
    %c0_1 = arith.constant 0 : index
    %c0_2 = arith.constant 0 : index
    %3 = vector.load %arg2[%c0, %c0_1, %c0_2] : memref<1x4x512xf32, #tpu.memory_space<vmem>>, vector<1x4x512xf32>
    %4 = vector.shape_cast %3 : vector<1x4x512xf32> to vector<4x512xf32>
    %c0_3 = arith.constant 0 : index
    %c0_4 = arith.constant 0 : index
    %c0_5 = arith.constant 0 : index
    %5 = vector.load %arg3[%c0_3, %c0_4, %c0_5] : memref<1x4x512xf32, #tpu.memory_space<vmem>>, vector<1x4x512xf32>
    %6 = vector.shape_cast %5 : vector<1x4x512xf32> to vector<4x512xf32>
    %c0_6 = arith.constant 0 : index
    %c0_7 = arith.constant 0 : index
    %c0_8 = arith.constant 0 : index
    %7 = vector.load %arg4[%c0_6, %c0_7, %c0_8] : memref<1x32x1xf32, #tpu.memory_space<vmem>>, vector<1x32x1xf32>
    %8 = vector.shape_cast %7 : vector<1x32x1xf32> to vector<32x1xf32>
    %c0_9 = arith.constant 0 : index
    %c0_10 = arith.constant 0 : index
    %9 = vector.load %arg5[%c0_9, %c0_10] : memref<32x4xf32, #tpu.memory_space<vmem>>, vector<32x4xf32>
    %cst = arith.constant dense<0.000000e+00> : vector<32x512xf32>
    %10 = tpu.matmul %9, %4, %cst {dimension_numbers = #tpu.dot_dimension_numbers<[1], [0], [0], [1], [0, 0, 1, 1], [], []>} : vector<32x4xf32>, vector<4x512xf32>, vector<32x512xf32> -> vector<32x512xf32>
    %11 = vector.broadcast %8 : vector<32x1xf32> to vector<32x512xf32>
    %12 = arith.addf %10, %11 : vector<32x512xf32>
    %cst_11 = arith.constant 0.000000e+00 : f32
    %13 = vector.broadcast %cst_11 : f32 to vector<32x512xf32>
    %14 = arith.maximumf %12, %13 : vector<32x512xf32>
    %c0_12 = arith.constant 0 : index
    %c0_13 = arith.constant 0 : index
    %15 = vector.load %arg6[%c0_12, %c0_13] : memref<4x32xf32, #tpu.memory_space<vmem>>, vector<4x32xf32>
    %cst_14 = arith.constant dense<0.000000e+00> : vector<4x512xf32>
    %16 = tpu.matmul %15, %14, %cst_14 {dimension_numbers = #tpu.dot_dimension_numbers<[1], [0], [0], [1], [0, 0, 1, 1], [], []>} : vector<4x32xf32>, vector<32x512xf32>, vector<4x512xf32> -> vector<4x512xf32>
    %c0_15 = arith.constant 0 : index
    %c0_16 = arith.constant 0 : index
    %17 = vector.load %arg7[%c0_15, %c0_16] : memref<4x1xf32, #tpu.memory_space<vmem>>, vector<4x1xf32>
    %18 = vector.broadcast %17 : vector<4x1xf32> to vector<4x512xf32>
    %19 = arith.addf %16, %18 : vector<4x512xf32>
    %20 = arith.subf %19, %6 : vector<4x512xf32>
    %21 = math.absf %20 : vector<4x512xf32>
    %c2_i32 = arith.constant 2 : i32
    %22 = arith.cmpi eq, %arg1, %c2_i32 : i32
    %23 = arith.extui %22 : i1 to i32
    %c0_i32_17 = arith.constant 0 : i32
    %24 = arith.cmpi ne, %23, %c0_i32_17 : i32
    scf.if %24 {
      %28 = tpu.iota {dimensions = array<i32: 1>} : vector<4x512xi32>
      %c512_i32 = arith.constant 512 : i32
      %29 = arith.muli %arg1, %c512_i32 : i32
      %30 = vector.broadcast %29 : i32 to vector<4x512xi32>
      %31 = arith.addi %30, %28 : vector<4x512xi32>
      %c1280_i32 = arith.constant 1280 : i32
      %32 = vector.broadcast %c1280_i32 : i32 to vector<4x512xi32>
      %33 = arith.cmpi slt, %31, %32 : vector<4x512xi32>
      %c0_19 = arith.constant 0 : index
      %c0_20 = arith.constant 0 : index
      %c0_21 = arith.constant 0 : index
      %34 = vector.load %arg8[%c0_19, %c0_20, %c0_21] : memref<1x4x512xf32, #tpu.memory_space<vmem>>, vector<1x4x512xf32>
      %cst_22 = arith.constant 0.000000e+00 : f32
      %35 = vector.broadcast %cst_22 : f32 to vector<4x512xf32>
      %36 = arith.select %33, %21, %35 : vector<4x512xi1>, vector<4x512xf32>
      %37 = vector.shape_cast %36 : vector<4x512xf32> to vector<1x4x512xf32>
      %38 = arith.addf %34, %37 : vector<1x4x512xf32>
      %c0_23 = arith.constant 0 : index
      %c0_24 = arith.constant 0 : index
      %c0_25 = arith.constant 0 : index
      %39 = vector.load %arg8[%c0_23, %c0_24, %c0_25] : memref<1x4x512xf32, #tpu.memory_space<vmem>>, vector<1x4x512xf32>
      tpu.vector_store %arg8[%c0_23, %c0_24, %c0_25], %38 {strides = array<i32>} : memref<1x4x512xf32, #tpu.memory_space<vmem>>, vector<1x4x512xf32>,
    } else {
    }
    %true = arith.constant true
    %25 = arith.xori %22, %true : i1
    %26 = arith.extui %25 : i1 to i32
    %c0_i32_18 = arith.constant 0 : i32
    %27 = arith.cmpi ne, %26, %c0_i32_18 : i32
    scf.if %27 {
      %c0_19 = arith.constant 0 : index
      %c0_20 = arith.constant 0 : index
      %c0_21 = arith.constant 0 : index
      %28 = vector.load %arg8[%c0_19, %c0_20, %c0_21] : memref<1x4x512xf32, #tpu.memory_space<vmem>>, vector<1x4x512xf32>
      %29 = vector.shape_cast %21 : vector<4x512xf32> to vector<1x4x512xf32>
      %30 = arith.addf %28, %29 : vector<1x4x512xf32>
      %c0_22 = arith.constant 0 : index
      %c0_23 = arith.constant 0 : index
      %c0_24 = arith.constant 0 : index
      %31 = vector.load %arg8[%c0_22, %c0_23, %c0_24] : memref<1x4x512xf32, #tpu.memory_space<vmem>>, vector<1x4x512xf32>
      tpu.vector_store %arg8[%c0_22, %c0_23, %c0_24], %30 {strides = array<i32>} : memref<1x4x512xf32, #tpu.memory_space<vmem>>, vector<1x4x512xf32>,
    } else {
    }
    return
  }
  func.func @transform_0(%arg0: i32, %arg1: i32) -> (i32, i32, i32) {
    %c0_i32 = arith.constant 0 : i32
    %c0_i32_0 = arith.constant 0 : i32
    return %arg0, %c0_i32, %arg1 : i32, i32, i32
  }
  func.func @transform_1(%arg0: i32, %arg1: i32) -> (i32, i32, i32) {
    %c0_i32 = arith.constant 0 : i32
    %c0_i32_0 = arith.constant 0 : i32
    return %arg0, %c0_i32, %arg1 : i32, i32, i32
  }
  func.func @transform_2(%arg0: i32, %arg1: i32) -> (i32, i32, i32) {
    %c0_i32 = arith.constant 0 : i32
    %c0_i32_0 = arith.constant 0 : i32
    %c0_i32_1 = arith.constant 0 : i32
    return %arg0, %c0_i32, %c0_i32_0 : i32, i32, i32
  }
  func.func @transform_3(%arg0: i32, %arg1: i32) -> (i32, i32) {
    %c0_i32 = arith.constant 0 : i32
    %c0_i32_0 = arith.constant 0 : i32
    %c0_i32_1 = arith.constant 0 : i32
    return %c0_i32, %c0_i32_0 : i32, i32
  }
  func.func @transform_4(%arg0: i32, %arg1: i32) -> (i32, i32) {
    %c0_i32 = arith.constant 0 : i32
    %c0_i32_0 = arith.constant 0 : i32
    %c0_i32_1 = arith.constant 0 : i32
    return %c0_i32, %c0_i32_0 : i32, i32
  }
  func.func @transform_5(%arg0: i32, %arg1: i32) -> (i32, i32) {
    %c0_i32 = arith.constant 0 : i32
    %c0_i32_0 = arith.constant 0 : i32
    %c0_i32_1 = arith.constant 0 : i32
    return %c0_i32, %c0_i32_0 : i32, i32
  }
  func.func @transform_6(%arg0: i32, %arg1: i32) -> (i32, i32, i32) {
    %c0_i32 = arith.constant 0 : i32
    %c0_i32_0 = arith.constant 0 : i32
    %c0_i32_1 = arith.constant 0 : i32
    return %arg0, %c0_i32, %c0_i32_0 : i32, i32, i32
  }
}

</mosaic_0001>

<llo_original>
// kernel: motion_model_forward.1
$region0: #{motion_model_forward.1}
  #allocation0 [shape = 'u32[]', space=smem, size = 0x4, offset = 0x4, fixed_abs, tag = 'smem constant byte address 0x4 - core index']
  #allocation1 [shape = 'u32[72,128]{1,0:T(1,128)}', space=vmem, size = 0x9000, scoped, tag = 'internal scratch']
  %s0 = inlined_call_operand.vmem [shape: f32[2,4,1280], index: 0, kind: input, shape index: {}]
  %s1 = inlined_call_operand.vmem [shape: f32[2,4,1280], index: 1, kind: input, shape index: {}]
  %s2 = inlined_call_operand.vmem [shape: f32[2,32,1], index: 2, kind: input, shape index: {}]
  %s3 = inlined_call_operand.vmem [shape: f32[32,4], index: 3, kind: input, shape index: {}]
  %s4 = inlined_call_operand.vmem [shape: f32[4,32], index: 4, kind: input, shape index: {}]
  %s5 = inlined_call_operand.vmem [shape: f32[4,1], index: 5, kind: input, shape index: {}]
  %s6 = inlined_call_operand.vmem [shape: f32[2,4,512], index: 6, kind: output, shape index: {}]
  %s7 = sld [smem:[#allocation0]]
  $region69: #{motion_model_forward.1} parent=0
    _
  %s9 = ssub.s32 1, %s7
  %s10 = scalar_select 0, %s9, %s7
  loop: start=0, step=1, limit=8
  $region2: #{motion_model_forward.1} parent=0 // loop_pre_header
    _
  $region3: #{motion_model_forward.1} parent=0 // loop_header
    %s12 = sphi 0, %s16
    %p13 = scmp.ge.s32.totalorder %s12, 8
    %s19 = sphi 0, %s31
    %s20 = sphi 0, %s27
    %s21 = sphi 0, %s19
    %s22 = sphi 0, %s20
    %s23 = sphi 0, %s21
    %s24 = sphi 0, %s22
    %s36 = sphi 0, %s38
    %s39 = sphi 0, %s36
    %s40 = sphi 0, %s39
    %s56 = sphi 0, %s40
    %s64 = sphi 0, %s66
    %s67 = sphi 0, %s64
    %s68 = sphi 0, %s67
    %s84 = sphi 0, %s68
    %s90 = sphi 0, %s92
    %s93 = sphi 0, %s90
    %s94 = sphi 0, %s93
    %s110 = sphi 0, %s94
    %s114 = sphi 0, %s114
    %s116 = sphi 0, %s114
    %s117 = sphi 0, %s116
    %s131 = sphi 0, %s117
    %s135 = sphi 0, %s135
    %s137 = sphi 0, %s135
    %s138 = sphi 0, %s137
    %s152 = sphi 0, %s138
    %s156 = sphi 0, %s156
    %s158 = sphi 0, %s156
    %s159 = sphi 0, %s158
    %s173 = sphi 0, %s159
    %s179 = sphi 0, %s181
    %s182 = sphi 0, %s179
    %s183 = sphi 0, %s182
    %s199 = sphi 0, %s183
  $region4: #{motion_model_forward.1} parent=0 // loop_header_branch
    %15 = sbr.rel (%p13) target = $region8
  $region5: #{motion_model_forward.1} parent=0 // loop_body
    %s17 = ssub.s32 %s12, 1
    %s18 = ssub.s32 %s12, 2
    %s25 = sadd.s32 1, %s20
    %p26 = scmp.ge.s32.totalorder %s25, 3
    %s27 = scalar_select %p26, 0, %s25
    %s28 = sadd.s32 1, %s19
    %s29 = scalar_select %p26, %s28, %s19
    %p30 = scmp.ge.s32.totalorder %s29, 2
    %s31 = scalar_select %p30, 0, %s29
    %s32 = ssub.s32 %s19, %s31
    %s33 = ssub.s32 %s20, %s27
    %s34 = sor.u32 %s32, %s33
    %p35 = scmp.eq.s32.totalorder %s34, 0
    %s37 = sadd.s32 %s36, 1
    %s38 = scalar_select %p35, %s36, %s37
    %p41 = pneg %p35
    %p42 = scmp.eq.s32.totalorder %s12, 5
    %p43 = por %p41, %p42
    %p44 = scmp.ne.s32.totalorder %s36, %s39
    %p45 = scmp.eq.s32.totalorder %s12, 0
    %p46 = por %p44, %p45
    %p47 = scmp.ne.s32.totalorder %s36, %s39
    %p48 = scmp.eq.s32.totalorder %s17, 5
    %p49 = por %p47, %p48
    %p50 = scmp.ne.s32.totalorder %s39, %s40
    %p51 = scmp.eq.s32.totalorder %s17, 0
    %p52 = por %p50, %p51
    %p53 = scmp.ne.s32.totalorder %s39, %s40
    %p54 = scmp.eq.s32.totalorder %s18, 5
    %p55 = por %p53, %p54
    %p57 = scmp.ne.s32.totalorder %s40, %s56
    %p58 = scmp.eq.s32.totalorder %s18, 0
    %p59 = por %p57, %p58
    %s60 = ssub.s32 %s19, %s31
    %s61 = ssub.s32 %s20, %s27
    %s62 = sor.u32 %s60, %s61
    %p63 = scmp.eq.s32.totalorder %s62, 0
    %s65 = sadd.s32 %s64, 1
    %s66 = scalar_select %p63, %s64, %s65
    %p69 = pneg %p63
    %p70 = scmp.eq.s32.totalorder %s12, 5
    %p71 = por %p69, %p70
    %p72 = scmp.ne.s32.totalorder %s64, %s67
    %p73 = scmp.eq.s32.totalorder %s12, 0
    %p74 = por %p72, %p73
    %p75 = scmp.ne.s32.totalorder %s64, %s67
    %p76 = scmp.eq.s32.totalorder %s17, 5
    %p77 = por %p75, %p76
    %p78 = scmp.ne.s32.totalorder %s67, %s68
    %p79 = scmp.eq.s32.totalorder %s17, 0
    %p80 = por %p78, %p79
    %p81 = scmp.ne.s32.totalorder %s67, %s68
    %p82 = scmp.eq.s32.totalorder %s18, 5
    %p83 = por %p81, %p82
    %p85 = scmp.ne.s32.totalorder %s68, %s84
    %p86 = scmp.eq.s32.totalorder %s18, 0
    %p87 = por %p85, %p86
    %s88 = ssub.s32 %s19, %s31
    %p89 = scmp.eq.s32.totalorder %s88, 0
    %s91 = sadd.s32 %s90, 1
    %s92 = scalar_select %p89, %s90, %s91
    %p95 = pneg %p89
    %p96 = scmp.eq.s32.totalorder %s12, 5
    %p97 = por %p95, %p96
    %p98 = scmp.ne.s32.totalorder %s90, %s93
    %p99 = scmp.eq.s32.totalorder %s12, 0
    %p100 = por %p98, %p99
    %p101 = scmp.ne.s32.totalorder %s90, %s93
    %p102 = scmp.eq.s32.totalorder %s17, 5
    %p103 = por %p101, %p102
    %p104 = scmp.ne.s32.totalorder %s93, %s94
    %p105 = scmp.eq.s32.totalorder %s17, 0
    %p106 = por %p104, %p105
    %p107 = scmp.ne.s32.totalorder %s93, %s94
    %p108 = scmp.eq.s32.totalorder %s18, 5
    %p109 = por %p107, %p108
    %p111 = scmp.ne.s32.totalorder %s94, %s110
    %p112 = scmp.eq.s32.totalorder %s18, 0
    %p113 = por %p111, %p112
    %s115 = sadd.s32 %s114, 1
    %p118 = scmp.eq.s32.totalorder %s12, 5
    %p119 = scmp.ne.s32.totalorder %s114, %s116
    %p120 = scmp.eq.s32.totalorder %s12, 0
    %p121 = por %p119, %p120
    %p122 = scmp.ne.s32.totalorder %s114, %s116
    %p123 = scmp.eq.s32.totalorder %s17, 5
    %p124 = por %p122, %p123
    %p125 = scmp.ne.s32.totalorder %s116, %s117
    %p126 = scmp.eq.s32.totalorder %s17, 0
    %p127 = por %p125, %p126
    %p128 = scmp.ne.s32.totalorder %s116, %s117
    %p129 = scmp.eq.s32.totalorder %s18, 5
    %p130 = por %p128, %p129
    %p132 = scmp.ne.s32.totalorder %s117, %s131
    %p133 = scmp.eq.s32.totalorder %s18, 0
    %p134 = por %p132, %p133
    %s136 = sadd.s32 %s135, 1
    %p139 = scmp.eq.s32.totalorder %s12, 5
    %p140 = scmp.ne.s32.totalorder %s135, %s137
    %p141 = scmp.eq.s32.totalorder %s12, 0
    %p142 = por %p140, %p141
    %p143 = scmp.ne.s32.totalorder %s135, %s137
    %p144 = scmp.eq.s32.totalorder %s17, 5
    %p145 = por %p143, %p144
    %p146 = scmp.ne.s32.totalorder %s137, %s138
    %p147 = scmp.eq.s32.totalorder %s17, 0
    %p148 = por %p146, %p147
    %p149 = scmp.ne.s32.totalorder %s137, %s138
    %p150 = scmp.eq.s32.totalorder %s18, 5
    %p151 = por %p149, %p150
    %p153 = scmp.ne.s32.totalorder %s138, %s152
    %p154 = scmp.eq.s32.totalorder %s18, 0
    %p155 = por %p153, %p154
    %s157 = sadd.s32 %s156, 1
    %p160 = scmp.eq.s32.totalorder %s12, 5
    %p161 = scmp.ne.s32.totalorder %s156, %s158
    %p162 = scmp.eq.s32.totalorder %s12, 0
    %p163 = por %p161, %p162
    %p164 = scmp.ne.s32.totalorder %s156, %s158
    %p165 = scmp.eq.s32.totalorder %s17, 5
    %p166 = por %p164, %p165
    %p167 = scmp.ne.s32.totalorder %s158, %s159
    %p168 = scmp.eq.s32.totalorder %s17, 0
    %p169 = por %p167, %p168
    %p170 = scmp.ne.s32.totalorder %s158, %s159
    %p171 = scmp.eq.s32.totalorder %s18, 5
    %p172 = por %p170, %p171
    %p174 = scmp.ne.s32.totalorder %s159, %s173
    %p175 = scmp.eq.s32.totalorder %s18, 0
    %p176 = por %p174, %p175
    %s177 = ssub.s32 %s19, %s31
    %p178 = scmp.eq.s32.totalorder %s177, 0
    %s180 = sadd.s32 %s179, 1
    %s181 = scalar_select %p178, %s179, %s180
    %p184 = pneg %p178
    %p185 = scmp.eq.s32.totalorder %s12, 5
    %p186 = por %p184, %p185
    %p187 = scmp.ne.s32.totalorder %s179, %s182
    %p188 = scmp.eq.s32.totalorder %s12, 0
    %p189 = por %p187, %p188
    %p190 = scmp.ne.s32.totalorder %s179, %s182
    %p191 = scmp.eq.s32.totalorder %s17, 5
    %p192 = por %p190, %p191
    %p193 = scmp.ne.s32.totalorder %s182, %s183
    %p194 = scmp.eq.s32.totalorder %s17, 0
    %p195 = por %p193, %p194
    %p196 = scmp.ne.s32.totalorder %s182, %s183
    %p197 = scmp.eq.s32.totalorder %s18, 5
    %p198 = por %p196, %p197
    %p200 = scmp.ne.s32.totalorder %s183, %s199
    %p201 = scmp.eq.s32.totalorder %s18, 0
    %p202 = por %p200, %p201
    %p203 = scmp.le.s32.totalorder 1, %s12
    %p204 = scmp.lt.s32.totalorder %s12, 7
    %p205 = pnand %p203, %p204
    %p206 = pneg %p205
    // Predicated region
    $region9: #{motion_model_forward.1} parent=5 // pred_check
      _
    $region10: #{motion_model_forward.1} parent=5 // pred_check_branch
      %208 = sbr.rel (%p205) target = $region12
    $region11: #{motion_model_forward.1} parent=5 // pred_region
      %s209 = ssub.s32 %s12, 1
      // Predicated region
      $region13: #{motion_model_forward.1} parent=11 // pred_check
        %p210 = pneg %p127
      $region14: #{motion_model_forward.1} parent=11 // pred_check_branch
        %212 = sbr.rel (%p210) target = $region16
      $region15: #{motion_model_forward.1} parent=11 // pred_region
        _
      $region16: #{motion_model_forward.1} parent=11 // pred_fallthru
        _
      // Predicated region
      $region17: #{motion_model_forward.1} parent=11 // pred_check
        %p213 = pneg %p148
      $region18: #{motion_model_forward.1} parent=11 // pred_check_branch
        %215 = sbr.rel (%p213) target = $region20
      $region19: #{motion_model_forward.1} parent=11 // pred_region
        _
      $region20: #{motion_model_forward.1} parent=11 // pred_fallthru
        _
      // Predicated region
      $region21: #{motion_model_forward.1} parent=11 // pred_check
        %p216 = pneg %p169
      $region22: #{motion_model_forward.1} parent=11 // pred_check_branch
        %218 = sbr.rel (%p216) target = $region24
      $region23: #{motion_model_forward.1} parent=11 // pred_region
        _
      $region24: #{motion_model_forward.1} parent=11 // pred_fallthru
        _
    $region12: #{motion_model_forward.1} parent=5 // pred_fallthru
      _
    %p219 = scmp.lt.s32.totalorder %s12, 6
    // Predicated region
    $region25: #{motion_model_forward.1} parent=5 // pred_check
      %p220 = pneg %p219
    $region26: #{motion_model_forward.1} parent=5 // pred_check_branch
      %222 = sbr.rel (%p220) target = $region28
    $region27: #{motion_model_forward.1} parent=5 // pred_region
      // Predicated region
      $region29: #{motion_model_forward.1} parent=27 // pred_check
        %p223 = pneg %p46
      $region30: #{motion_model_forward.1} parent=27 // pred_check_branch
        %225 = sbr.rel (%p223) target = $region32
      $region31: #{motion_model_forward.1} parent=27 // pred_region
        %s226 = smul.u32 4, %s20
        %s227 = ssub.s32 10, %s226
        %p228 = scmp.lt.s32.totalorder %s227, 4
        %s229 = scalar_select %p228, %s227, 4
        %s230 = smul.u32 4, %s229
        %p231 = scmp.lt.s32.totalorder %s19, 1
        %s232 = scalar_select %p231, %s19, 1
        %p233 = scmp.lt.s32.totalorder %s226, 9
        %s234 = scalar_select %p233, %s226, 9
        %s235 = smul.addr %s232, 10
        %s236 = sadd.s32 %s234, %s235
        %s237 = smul.addr %s236, 4
        %s238 = scalar_lea.vmem %s0, %s237
        %s239 = smul.u32 4, %s20
        %s240 = ssub.s32 10, %s239
        %p241 = scmp.lt.s32.totalorder %s240, 4
        %s242 = scalar_select %p241, %s240, 4
        %s243 = smul.u32 4, %s242
      $region32: #{motion_model_forward.1} parent=27 // pred_fallthru
        _
      // Predicated region
      $region33: #{motion_model_forward.1} parent=27 // pred_check
        %p244 = pneg %p74
      $region34: #{motion_model_forward.1} parent=27 // pred_check_branch
        %246 = sbr.rel (%p244) target = $region36
      $region35: #{motion_model_forward.1} parent=27 // pred_region
        %s247 = smul.u32 4, %s20
        %s248 = ssub.s32 10, %s247
        %p249 = scmp.lt.s32.totalorder %s248, 4
        %s250 = scalar_select %p249, %s248, 4
        %s251 = smul.u32 4, %s250
        %p252 = scmp.lt.s32.totalorder %s19, 1
        %s253 = scalar_select %p252, %s19, 1
        %p254 = scmp.lt.s32.totalorder %s247, 9
        %s255 = scalar_select %p254, %s247, 9
        %s256 = smul.addr %s253, 10
        %s257 = sadd.s32 %s255, %s256
        %s258 = smul.addr %s257, 4
        %s259 = scalar_lea.vmem %s1, %s258
        %s260 = smul.u32 4, %s20
        %s261 = ssub.s32 10, %s260
        %p262 = scmp.lt.s32.totalorder %s261, 4
        %s263 = scalar_select %p262, %s261, 4
        %s264 = smul.u32 4, %s263
      $region36: #{motion_model_forward.1} parent=27 // pred_fallthru
        _
      // Predicated region
      $region37: #{motion_model_forward.1} parent=27 // pred_check
        %p265 = pneg %p100
      $region38: #{motion_model_forward.1} parent=27 // pred_check_branch
        %267 = sbr.rel (%p265) target = $region40
      $region39: #{motion_model_forward.1} parent=27 // pred_region
        %p268 = scmp.lt.s32.totalorder %s19, 1
        %s269 = scalar_select %p268, %s19, 1
        %s270 = smul.addr %s269, 4
        %s271 = smul.addr %s270, 8
        %s272 = scalar_lea.vmem %s2, %s271
      $region40: #{motion_model_forward.1} parent=27 // pred_fallthru
        _
    $region28: #{motion_model_forward.1} parent=5 // pred_fallthru
      _
    %p273 = scmp.le.s32.totalorder 1, %s12
    %p274 = scmp.lt.s32.totalorder %s12, 7
    %p275 = pnand %p273, %p274
    %p276 = pneg %p275
    // Predicated region
    $region41: #{motion_model_forward.1} parent=5 // pred_check
      _
    $region42: #{motion_model_forward.1} parent=5 // pred_check_branch
      %278 = sbr.rel (%p275) target = $region44
    $region43: #{motion_model_forward.1} parent=5 // pred_region
      %s279 = ssub.s32 %s12, 1
      %s280 = smul.u32 4, %s22
      %s281 = ssub.s32 10, %s280
      %p282 = scmp.lt.s32.totalorder %s281, 4
      %s283 = scalar_select %p282, %s281, 4
      %s284 = smul.u32 4, %s283
      %p285 = scmp.lt.s32.totalorder %s21, 1
      %s286 = scalar_select %p285, %s21, 1
      %p287 = scmp.lt.s32.totalorder %s280, 9
      %s288 = scalar_select %p287, %s280, 9
      %s289 = smul.addr %s286, 10
      %s290 = sadd.s32 %s288, %s289
      %s291 = smul.addr %s290, 4
      %s292 = scalar_lea.vmem %s0, %s291
      %p293 = pneg %p52
      %p294 = pneg %p49
      %s295 = smul.u32 4, %s22
      %s296 = ssub.s32 10, %s295
      %p297 = scmp.lt.s32.totalorder %s296, 4
      %s298 = scalar_select %p297, %s296, 4
      %s299 = smul.u32 4, %s298
      %p300 = scmp.lt.s32.totalorder %s21, 1
      %s301 = scalar_select %p300, %s21, 1
      %p302 = scmp.lt.s32.totalorder %s295, 9
      %s303 = scalar_select %p302, %s295, 9
      %s304 = smul.addr %s301, 10
      %s305 = sadd.s32 %s303, %s304
      %s306 = smul.addr %s305, 4
      %s307 = scalar_lea.vmem %s1, %s306
      %p308 = pneg %p80
      %p309 = pneg %p77
      %p310 = scmp.lt.s32.totalorder %s21, 1
      %s311 = scalar_select %p310, %s21, 1
      %s312 = smul.addr %s311, 4
      %s313 = smul.addr %s312, 8
      %s314 = scalar_lea.vmem %s2, %s313
      %p315 = pneg %p106
      %p316 = pneg %p103
      %p317 = pneg %p127
      %p318 = pneg %p124
      %p319 = pneg %p148
      %p320 = pneg %p145
      %p321 = pneg %p169
      %p322 = pneg %p166
      %p323 = pneg %p195
      %p324 = pneg %p192
      %p325 = scmp.lt.s32.totalorder %s21, 1
      %s326 = scalar_select %p325, %s21, 1
      %s327 = smul.addr %s326, 4
      %s328 = smul.addr %s327, 4
      %s329 = scalar_lea.vmem %s6, %s328
      %s330 = smul.u32 4, %s22
      %s331 = ssub.s32 10, %s330
      %p332 = scmp.lt.s32.totalorder %s331, 4
      %s333 = scalar_select %p332, %s331, 4
      %s334 = smul.u32 4, %s333
      %p335 = scmp.lt.s32.totalorder %s21, 1
      %s336 = scalar_select %p335, %s21, 1
      %p337 = scmp.lt.s32.totalorder %s330, 9
      %s338 = scalar_select %p337, %s330, 9
      %s339 = smul.addr %s336, 10
      %s340 = sadd.s32 %s338, %s339
      %s341 = smul.addr %s340, 4
      %s342 = scalar_lea.vmem %s0, %s341
      %s343 = smul.u32 4, %s22
      %s344 = ssub.s32 10, %s343
      %p345 = scmp.lt.s32.totalorder %s344, 4
      %s346 = scalar_select %p345, %s344, 4
      %s347 = smul.u32 4, %s346
      %s348 = smul.u32 4, %s22
      %s349 = ssub.s32 10, %s348
      %p350 = scmp.lt.s32.totalorder %s349, 4
      %s351 = scalar_select %p350, %s349, 4
      %s352 = smul.u32 4, %s351
      %p353 = scmp.lt.s32.totalorder %s21, 1
      %s354 = scalar_select %p353, %s21, 1
      %p355 = scmp.lt.s32.totalorder %s348, 9
      %s356 = scalar_select %p355, %s348, 9
      %s357 = smul.addr %s354, 10
      %s358 = sadd.s32 %s356, %s357
      %s359 = smul.addr %s358, 4
      %s360 = scalar_lea.vmem %s1, %s359
      %s361 = smul.u32 4, %s22
      %s362 = ssub.s32 10, %s361
      %p363 = scmp.lt.s32.totalorder %s362, 4
      %s364 = scalar_select %p363, %s362, 4
      %s365 = smul.u32 4, %s364
      %p366 = scmp.lt.s32.totalorder %s21, 1
      %s367 = scalar_select %p366, %s21, 1
      %s368 = smul.addr %s367, 4
      %s369 = smul.addr %s368, 8
      %s370 = scalar_lea.vmem %s2, %s369
      %p371 = scmp.lt.s32.totalorder %s21, 1
      %s372 = scalar_select %p371, %s21, 1
      %s373 = smul.addr %s372, 4
      %s374 = smul.addr %s373, 4
      %s375 = scalar_lea.vmem %s6, %s374
      %p376 = scmp.eq.s32.totalorder %s22, 0
      // Predicated region
      $region45: #{motion_model_forward.1} parent=43 // pred_check
        %p377 = pneg %p376
      $region46: #{motion_model_forward.1} parent=43 // pred_check_branch
        %379 = sbr.rel (%p377) target = $region48
      $region47: #{motion_model_forward.1} parent=43 // pred_region
        %380 = vst [vmem:[%s375] sm:$0xff] 0.0
        %381 = vst [vmem:[%s375 + $0x8] sm:$0xff] 0.0
      $region48: #{motion_model_forward.1} parent=43 // pred_fallthru
        _
      %v382 = vld [vmem:[%s342] sm:$0xff]
      %v383 = vld [vmem:[%s342 + $0x8] sm:$0xff]
      %v384 = vld [vmem:[%s360] sm:$0xff]
      %v385 = vld [vmem:[%s360 + $0x8] sm:$0xff]
      %v386 = vld [vmem:[%s370] sm:$0xff]
      %v387 = vld [vmem:[%s370 + $0x8] sm:$0xff]
      %v388 = vld [vmem:[%s370 + $0x10] sm:$0xff]
      %v389 = vld [vmem:[%s370 + $0x18] sm:$0xff]
      %v390 = vld [vmem:[%s3] sm:$0xff]
      %v391 = vld [vmem:[%s3 + $0x8] sm:$0xff]
      %v392 = vld [vmem:[%s3 + $0x10] sm:$0xff]
      %v393 = vld [vmem:[%s3 + $0x18] sm:$0xff]
      %395 = vset.pattern.permute.xlu0 0
      %396 = vperm.xlu0 %395, %v386
      %v397 = vpop.permute.xlu0 %396
      %400 = vset.pattern.permute.xlu0 0
      %401 = vperm.xlu0 %400, %v387
      %v402 = vpop.permute.xlu0 %401
      %405 = vset.pattern.permute.xlu0 0
      %406 = vperm.xlu0 %405, %v388
      %v407 = vpop.permute.xlu0 %406
      %410 = vset.pattern.permute.xlu0 0
      %411 = vperm.xlu0 %410, %v389
      %v412 = vpop.permute.xlu0 %411
      %416 = vst [vmem:[#allocation1] ss:$2 sm:$0xff] %v382
      %s417 = scalar_lea.vmem [#allocation1], 16
      %418 = vst [vmem:[%s417] ss:$2 sm:$0xff] %v383
      %v419 = vld.sshfl [vmem:[#allocation1] sm:$0xff pattern:$0x75316420]
      %v420 = vld.sshfl [vmem:[#allocation1 + $0x8] sm:$0xff pattern:$0x75316420]
      %v421 = vld.sshfl [vmem:[#allocation1 + $0x10] sm:$0xff pattern:$0x75316420]
      %v422 = vld.sshfl [vmem:[#allocation1 + $0x18] sm:$0xff pattern:$0x75316420]
      %vm423 = vcmask 31744
      %v425 = vsel %vm423, %v390, 0
      %v428 = vsel %vm423, %v391, 0
      %v431 = vsel %vm423, %v392, 0
      %v434 = vsel %vm423, %v393, 0
      %vm436 = vcmask 1043456
      %v437 = vsel %vm436, %v419, 0
      %v439 = vsel %vm436, %v420, 0
      %v441 = vsel %vm436, %v421, 0
      %v443 = vsel %vm436, %v422, 0
      %445 = vmatpush.msra.mxu0 0.0
      %446 = vmatpush.msra.mxu0 0.0
      %447 = vmatpush.msra.mxu0 0.0
      %448 = vmatpush.msra.mxu0 0.0
      %449 = vmatpush.msra.mxu0 0.0
      %450 = vmatpush.msra.mxu0 0.0
      %451 = vmatpush.msra.mxu0 0.0
      %452 = vmatpush.msra.mxu0 0.0
      %453 = vmatpush.msra.mxu0 0.0
      %454 = vmatpush.msra.mxu0 0.0
      %455 = vmatpush.msra.mxu0 0.0
      %456 = vmatpush.msra.mxu0 0.0
      %457 = vmatpush.msra.mxu0 0.0
      %458 = vmatpush.msra.mxu0 0.0
      %459 = vmatpush.msra.mxu0 0.0
      %460 = vmatpush.msra.mxu0 %v437
      %461 = vmatmul.f32.gmra.mxu0 %v425
      %v462 = vpop.f32.mrf.mxu0
      %v463 = vadd.f32 %v397, %v462
      %464 = vmatmul.f32.gmra.mxu0 %v428
      %v465 = vpop.f32.mrf.mxu0
      %v466 = vadd.f32 %v402, %v465
      %467 = vmatmul.f32.gmra.mxu0 %v431
      %v468 = vpop.f32.mrf.mxu0
      %v469 = vadd.f32 %v407, %v468
      %470 = vmatmul.f32.gmra.mxu0 %v434
      %v471 = vpop.f32.mrf.mxu0
      %v472 = vadd.f32 %v412, %v471
      %473 = vdwg.mxu0
      %474 = vmatpush.msra.mxu0 0.0
      %475 = vmatpush.msra.mxu0 0.0
      %476 = vmatpush.msra.mxu0 0.0
      %477 = vmatpush.msra.mxu0 0.0
      %478 = vmatpush.msra.mxu0 0.0
      %479 = vmatpush.msra.mxu0 0.0
      %480 = vmatpush.msra.mxu0 0.0
      %481 = vmatpush.msra.mxu0 0.0
      %482 = vmatpush.msra.mxu0 0.0
      %483 = vmatpush.msra.mxu0 0.0
      %484 = vmatpush.msra.mxu0 0.0
      %485 = vmatpush.msra.mxu0 0.0
      %486 = vmatpush.msra.mxu0 0.0
      %487 = vmatpush.msra.mxu0 0.0
      %488 = vmatpush.msra.mxu0 0.0
      %489 = vmatpush.msra.mxu0 %v439
      %490 = vmatmul.f32.gmra.mxu0 %v425
      %v491 = vpop.f32.mrf.mxu0
      %v492 = vadd.f32 %v397, %v491
      %493 = vmatmul.f32.gmra.mxu0 %v428
      %v494 = vpop.f32.mrf.mxu0
      %v495 = vadd.f32 %v402, %v494
      %496 = vmatmul.f32.gmra.mxu0 %v431
      %v497 = vpop.f32.mrf.mxu0
      %v498 = vadd.f32 %v407, %v497
      %499 = vmatmul.f32.gmra.mxu0 %v434
      %v500 = vpop.f32.mrf.mxu0
      %v501 = vadd.f32 %v412, %v500
      %502 = vdwg.mxu0
      %503 = vmatpush.msra.mxu0 0.0
      %504 = vmatpush.msra.mxu0 0.0
      %505 = vmatpush.msra.mxu0 0.0
      %506 = vmatpush.msra.mxu0 0.0
      %507 = vmatpush.msra.mxu0 0.0
      %508 = vmatpush.msra.mxu0 0.0
      %509 = vmatpush.msra.mxu0 0.0
      %510 = vmatpush.msra.mxu0 0.0
      %511 = vmatpush.msra.mxu0 0.0
      %512 = vmatpush.msra.mxu0 0.0
      %513 = vmatpush.msra.mxu0 0.0
      %514 = vmatpush.msra.mxu0 0.0
      %515 = vmatpush.msra.mxu0 0.0
      %516 = vmatpush.msra.mxu0 0.0
      %517 = vmatpush.msra.mxu0 0.0
      %518 = vmatpush.msra.mxu0 %v441
      %519 = vmatmul.f32.gmra.mxu0 %v425
      %v520 = vpop.f32.mrf.mxu0
      %v521 = vadd.f32 %v397, %v520
      %522 = vmatmul.f32.gmra.mxu0 %v428
      %v523 = vpop.f32.mrf.mxu0
      %v524 = vadd.f32 %v402, %v523
      %525 = vmatmul.f32.gmra.mxu0 %v431
      %v526 = vpop.f32.mrf.mxu0
      %v527 = vadd.f32 %v407, %v526
      %528 = vmatmul.f32.gmra.mxu0 %v434
      %v529 = vpop.f32.mrf.mxu0
      %v530 = vadd.f32 %v412, %v529
      %531 = vdwg.mxu0
      %532 = vmatpush.msra.mxu0 0.0
      %533 = vmatpush.msra.mxu0 0.0
      %534 = vmatpush.msra.mxu0 0.0
      %535 = vmatpush.msra.mxu0 0.0
      %536 = vmatpush.msra.mxu0 0.0
      %537 = vmatpush.msra.mxu0 0.0
      %538 = vmatpush.msra.mxu0 0.0
      %539 = vmatpush.msra.mxu0 0.0
      %540 = vmatpush.msra.mxu0 0.0
      %541 = vmatpush.msra.mxu0 0.0
      %542 = vmatpush.msra.mxu0 0.0
      %543 = vmatpush.msra.mxu0 0.0
      %544 = vmatpush.msra.mxu0 0.0
      %545 = vmatpush.msra.mxu0 0.0
      %546 = vmatpush.msra.mxu0 0.0
      %547 = vmatpush.msra.mxu0 %v443
      %548 = vmatmul.f32.gmra.mxu0 %v425
      %v549 = vpop.f32.mrf.mxu0
      %v550 = vadd.f32 %v397, %v549
      %551 = vmatmul.f32.gmra.mxu0 %v428
      %v552 = vpop.f32.mrf.mxu0
      %v553 = vadd.f32 %v402, %v552
      %554 = vmatmul.f32.gmra.mxu0 %v431
      %v555 = vpop.f32.mrf.mxu0
      %v556 = vadd.f32 %v407, %v555
      %557 = vmatmul.f32.gmra.mxu0 %v434
      %v558 = vpop.f32.mrf.mxu0
      %v559 = vadd.f32 %v412, %v558
      %560 = vdwg.mxu0
      %v561 = vmax.f32 %v463, 0.0
      %v562 = vmax.f32 %v492, 0.0
      %v563 = vmax.f32 %v521, 0.0
      %v564 = vmax.f32 %v550, 0.0
      %v565 = vmax.f32 %v466, 0.0
      %v566 = vmax.f32 %v495, 0.0
      %v567 = vmax.f32 %v524, 0.0
      %v568 = vmax.f32 %v553, 0.0
      %v569 = vmax.f32 %v469, 0.0
      %v570 = vmax.f32 %v498, 0.0
      %v571 = vmax.f32 %v527, 0.0
      %v572 = vmax.f32 %v556, 0.0
      %v573 = vmax.f32 %v472, 0.0
      %v574 = vmax.f32 %v501, 0.0
      %v575 = vmax.f32 %v530, 0.0
      %v576 = vmax.f32 %v559, 0.0
      %v577 = vld [vmem:[%s4] sm:$0xf]
      %v578 = vld [vmem:[%s5] sm:$0xf]
      %580 = vset.pattern.permute.xlu0 0
      %581 = vperm.xlu0 %580, %v578
      %v582 = vpop.permute.xlu0 %581
      %vm584 = vcmask 261120
      %v586 = vsel %vm584, %v577, 0
      %588 = vmatpush.msra.mxu0 0.0
      %589 = vmatpush.msra.mxu0 0.0
      %590 = vmatpush.msra.mxu0 0.0
      %591 = vmatpush.msra.mxu0 0.0
      %592 = vmatpush.msra.mxu0 0.0
      %593 = vmatpush.msra.mxu0 0.0
      %594 = vmatpush.msra.mxu0 0.0
      %595 = vmatpush.msra.mxu0 0.0
      %596 = vmatpush.msra.mxu0 0.0
      %597 = vmatpush.msra.mxu0 0.0
      %598 = vmatpush.msra.mxu0 0.0
      %599 = vmatpush.msra.mxu0 0.0
      %600 = vmatpush.msra.mxu0 %v573
      %601 = vmatpush.msra.mxu0 %v569
      %602 = vmatpush.msra.mxu0 %v565
      %603 = vmatpush.msra.mxu0 %v561
      %604 = vmatmul.f32.gmra.mxu0 %v586
      %v605 = vpop.f32.mrf.mxu0
      %v606 = vadd.f32 %v582, %v605
      %607 = vdwg.mxu0
      %608 = vmatpush.msra.mxu0 0.0
      %609 = vmatpush.msra.mxu0 0.0
      %610 = vmatpush.msra.mxu0 0.0
      %611 = vmatpush.msra.mxu0 0.0
      %612 = vmatpush.msra.mxu0 0.0
      %613 = vmatpush.msra.mxu0 0.0
      %614 = vmatpush.msra.mxu0 0.0
      %615 = vmatpush.msra.mxu0 0.0
      %616 = vmatpush.msra.mxu0 0.0
      %617 = vmatpush.msra.mxu0 0.0
      %618 = vmatpush.msra.mxu0 0.0
      %619 = vmatpush.msra.mxu0 0.0
      %620 = vmatpush.msra.mxu0 %v574
      %621 = vmatpush.msra.mxu0 %v570
      %622 = vmatpush.msra.mxu0 %v566
      %623 = vmatpush.msra.mxu0 %v562
      %624 = vmatmul.f32.gmra.mxu0 %v586
      %v625 = vpop.f32.mrf.mxu0
      %v626 = vadd.f32 %v582, %v625
      %627 = vdwg.mxu0
      %628 = vmatpush.msra.mxu0 0.0
      %629 = vmatpush.msra.mxu0 0.0
      %630 = vmatpush.msra.mxu0 0.0
      %631 = vmatpush.msra.mxu0 0.0
      %632 = vmatpush.msra.mxu0 0.0
      %633 = vmatpush.msra.mxu0 0.0
      %634 = vmatpush.msra.mxu0 0.0
      %635 = vmatpush.msra.mxu0 0.0
      %636 = vmatpush.msra.mxu0 0.0
      %637 = vmatpush.msra.mxu0 0.0
      %638 = vmatpush.msra.mxu0 0.0
      %639 = vmatpush.msra.mxu0 0.0
      %640 = vmatpush.msra.mxu0 %v575
      %641 = vmatpush.msra.mxu0 %v571
      %642 = vmatpush.msra.mxu0 %v567
      %643 = vmatpush.msra.mxu0 %v563
      %644 = vmatmul.f32.gmra.mxu0 %v586
      %v645 = vpop.f32.mrf.mxu0
      %v646 = vadd.f32 %v582, %v645
      %647 = vdwg.mxu0
      %648 = vmatpush.msra.mxu0 0.0
      %649 = vmatpush.msra.mxu0 0.0
      %650 = vmatpush.msra.mxu0 0.0
      %651 = vmatpush.msra.mxu0 0.0
      %652 = vmatpush.msra.mxu0 0.0
      %653 = vmatpush.msra.mxu0 0.0
      %654 = vmatpush.msra.mxu0 0.0
      %655 = vmatpush.msra.mxu0 0.0
      %656 = vmatpush.msra.mxu0 0.0
      %657 = vmatpush.msra.mxu0 0.0
      %658 = vmatpush.msra.mxu0 0.0
      %659 = vmatpush.msra.mxu0 0.0
      %660 = vmatpush.msra.mxu0 %v576
      %661 = vmatpush.msra.mxu0 %v572
      %662 = vmatpush.msra.mxu0 %v568
      %663 = vmatpush.msra.mxu0 %v564
      %664 = vmatmul.f32.gmra.mxu0 %v586
      %v665 = vpop.f32.mrf.mxu0
      %v666 = vadd.f32 %v582, %v665
      %667 = vdwg.mxu0
      %670 = vst [vmem:[#allocation1] ss:$2 sm:$0xff] %v384
      %s671 = scalar_lea.vmem [#allocation1], 16
      %672 = vst [vmem:[%s671] ss:$2 sm:$0xff] %v385
      %v673 = vld.sshfl [vmem:[#allocation1] sm:$0xff pattern:$0x75316420]
      %v674 = vld.sshfl [vmem:[#allocation1 + $0x8] sm:$0xff pattern:$0x75316420]
      %v675 = vld.sshfl [vmem:[#allocation1 + $0x10] sm:$0xff pattern:$0x75316420]
      %v676 = vld.sshfl [vmem:[#allocation1 + $0x18] sm:$0xff pattern:$0x75316420]
      %v681 = vsub.f32 %v606, %v673
      %v682 = vsub.f32 %v626, %v674
      %v683 = vsub.f32 %v646, %v675
      %v684 = vsub.f32 %v666, %v676
      %v685 = vand.u32 2147483647, %v681
      %v686 = vand.u32 2147483647, %v682
      %v687 = vand.u32 2147483647, %v683
      %v688 = vand.u32 2147483647, %v684
      %p689 = scmp.eq.s32.totalorder %s22, 2
      // Predicated region
      $region49: #{motion_model_forward.1} parent=43 // pred_check
        %p690 = pneg %p689
      $region50: #{motion_model_forward.1} parent=43 // pred_check_branch
        %692 = sbr.rel (%p690) target = $region52
      $region51: #{motion_model_forward.1} parent=43 // pred_region
        %v693 = vlaneseq
        %v694 = vand.u32 %v693, 127
        %v695 = vadd.s32 %v694, 128
        %v696 = vadd.s32 %v694, 256
        %v697 = vadd.s32 %v694, 384
        %s698 = smul.u32 %s22, 512
        %v699 = vstv %s698
        %v700 = vadd.s32 %v699, %v694
        %v701 = vadd.s32 %v699, %v695
        %v702 = vadd.s32 %v699, %v696
        %v703 = vadd.s32 %v699, %v697
        %vm704 = vcmp.lt.s32.totalorder %v700, 1280
        %vm705 = vcmp.lt.s32.totalorder %v701, 1280
        %vm706 = vcmp.lt.s32.totalorder %v702, 1280
        %vm707 = vcmp.lt.s32.totalorder %v703, 1280
        %v708 = vld [vmem:[%s375] sm:$0xff]
        %v709 = vld [vmem:[%s375 + $0x8] sm:$0xff]
        %v710 = vsel %vm704, %v685, 0.0
        %v711 = vsel %vm705, %v686, 0.0
        %v712 = vsel %vm706, %v687, 0.0
        %v713 = vsel %vm707, %v688, 0.0
        %v718 = vrot.slane %v711, 4
        %v719 = vrot.slane %v713, 4
        %v720 = vsel %vm436, %v710, %v718
        %v721 = vsel %vm436, %v712, %v719
        %v724 = vadd.f32 %v708, %v720
        %v725 = vadd.f32 %v709, %v721
        %726 = vst [vmem:[%s375] sm:$0xff] %v724
        %727 = vst [vmem:[%s375 + $0x8] sm:$0xff] %v725
      $region52: #{motion_model_forward.1} parent=43 // pred_fallthru
        _
      %p728 = scmp.ne.s32.totalorder %s22, 2
      // Predicated region
      $region53: #{motion_model_forward.1} parent=43 // pred_check
        %p729 = pneg %p728
      $region54: #{motion_model_forward.1} parent=43 // pred_check_branch
        %731 = sbr.rel (%p729) target = $region56
      $region55: #{motion_model_forward.1} parent=43 // pred_region
        %v732 = vld [vmem:[%s375] sm:$0xff]
        %v733 = vld [vmem:[%s375 + $0x8] sm:$0xff]
        %v738 = vrot.slane %v686, 4
        %v739 = vrot.slane %v688, 4
        %v740 = vsel %vm436, %v685, %v738
        %v741 = vsel %vm436, %v687, %v739
        %v744 = vadd.f32 %v732, %v740
        %v745 = vadd.f32 %v733, %v741
        %746 = vst [vmem:[%s375] sm:$0xff] %v744
        %747 = vst [vmem:[%s375 + $0x8] sm:$0xff] %v745
      $region56: #{motion_model_forward.1} parent=43 // pred_fallthru
        _
      %p748 = scmp.lt.s32.totalorder %s21, 1
      %s749 = scalar_select %p748, %s21, 1
      %s750 = smul.addr %s749, 4
      %s751 = smul.addr %s750, 4
      %s752 = scalar_lea.vmem %s6, %s751
      // Predicated region
      $region57: #{motion_model_forward.1} parent=43 // pred_check
        %p753 = pneg %p192
      $region58: #{motion_model_forward.1} parent=43 // pred_check_branch
        %755 = sbr.rel (%p753) target = $region60
      $region59: #{motion_model_forward.1} parent=43 // pred_region
        _
      $region60: #{motion_model_forward.1} parent=43 // pred_fallthru
        _
    $region44: #{motion_model_forward.1} parent=5 // pred_fallthru
      _
    %p756 = scmp.le.s32.totalorder 2, %s12
    // Predicated region
    $region61: #{motion_model_forward.1} parent=5 // pred_check
      %p757 = pneg %p756
    $region62: #{motion_model_forward.1} parent=5 // pred_check_branch
      %759 = sbr.rel (%p757) target = $region64
    $region63: #{motion_model_forward.1} parent=5 // pred_region
      %s760 = ssub.s32 %s12, 2
      // Predicated region
      $region65: #{motion_model_forward.1} parent=63 // pred_check
        %p761 = pneg %p198
      $region66: #{motion_model_forward.1} parent=63 // pred_check_branch
        %763 = sbr.rel (%p761) target = $region68
      $region67: #{motion_model_forward.1} parent=63 // pred_region
        %p764 = scmp.lt.s32.totalorder %s23, 1
        %s765 = scalar_select %p764, %s23, 1
        %s766 = smul.addr %s765, 4
        %s767 = smul.addr %s766, 4
        %s768 = scalar_lea.vmem %s6, %s767
      $region68: #{motion_model_forward.1} parent=63 // pred_fallthru
        _
    $region64: #{motion_model_forward.1} parent=5 // pred_fallthru
      _
  $region6: #{motion_model_forward.1} parent=0 // loop_footer
    %s16 = sadd.s32 1, %s12
  $region7: #{motion_model_forward.1} parent=0 // loop_footer_branch
    %11 = sbr.rel target = $region3
  $region8: #{motion_model_forward.1} parent=0 // loop_exit
    _

</llo_original>
